<compile_context>
chip_gen: v7x
topology: tpu7x:2x2x1
jax: 0.10.0
libtpu: 0.0.40
codegen_flags: <defaults>
</compile_context>

<pallas_src>
import functools

import jax
import jax.numpy as jnp
from jax.experimental import pallas as pl
from jax.experimental.pallas import tpu as pltpu

# --- static module "parameters" (deterministic __init__ defaults) ---
CHANNEL_NUMBER = 0
CLASS_IDX = 0
CLASS_GAMMA = 0.5
DOMAIN_EPS = 0.01
WO_CLIP = False

_LANE = 128
_MAX_TILE_BYTES = 8 * 1024 * 1024  # per pipeline buffer; safe for v7x 64 MiB VMEM


def _objective_kernel(ch_ref, dec_ref, img_ref, txt_ref,
                      loss_ref, clip_ref, act_ref, acc_ref,
                      *, inv_hw, inv_b):
    t = pl.program_id(0)

    @pl.when(t == 0)
    def _init():
        acc_ref[...] = jnp.zeros_like(acc_ref)

    # Accumulate the spatial sum of the (pre-selected) channel for this HW tile.
    # Inputs stay in their source dtype in HBM; accumulate in f32.
    tile = ch_ref[...].astype(jnp.float32)                       # [B, HW_TILE]
    acc_ref[...] += jnp.sum(tile, axis=-1, keepdims=True)        # [B, 1]

    @pl.when(t == pl.num_programs(0) - 1)
    def _finalize():
        act = acc_ref[...] * inv_hw                              # [B, 1] spatial mean
        logits = dec_ref[...].astype(jnp.float32)                # [B, 1] class column
        loss_act = act + logits * CLASS_GAMMA                    # [B, 1]
        # diag(img @ text.T) == row-wise dot product
        loss_clip = jnp.sum(img_ref[...].astype(jnp.float32) *
                            txt_ref[...].astype(jnp.float32),
                            axis=-1, keepdims=True)              # [B, 1]
        loss = -1.0 * (loss_clip + DOMAIN_EPS) * loss_act        # [B, 1]
        loss_ref[...] = jnp.sum(loss, keepdims=True) * inv_b     # (1, 1)
        clip_ref[...] = jnp.sum(loss_clip, keepdims=True) * inv_b
        act_ref[...] = jnp.sum(loss_act, keepdims=True) * inv_b


def class_conditional_objective(layer_out, decision_out, img_feats, text_feats):
    """layer_out: [B, C, H, W] (NCHW); decision_out: [B, NC]; feats: [B, D]."""
    B, C, H, W = layer_out.shape
    hw = H * W
    D = img_feats.shape[-1]

    # Select only the channel / class column actually used: the kernel DMAs
    # B*HW (not B*C*HW) activations and B (not B*NC) logits.
    ch = layer_out[:, CHANNEL_NUMBER, :, :].reshape(B, hw)
    dec = decision_out[:, CLASS_IDX:CLASS_IDX + 1]

    # Lane-dense HW tiling: multiple of 128, capped so one (double-buffered)
    # tile stays well under the scoped-VMEM limit even on v7x.
    itemsize = int(jnp.dtype(ch.dtype).itemsize)
    hw_pad = pl.cdiv(hw, _LANE) * _LANE
    max_tile = max(_LANE, (_MAX_TILE_BYTES // (max(B, 1) * itemsize)) // _LANE * _LANE)
    hw_tile = min(hw_pad, max_tile, 8192)
    hw_pad = pl.cdiv(hw_pad, hw_tile) * hw_tile
    if hw_pad != hw:
        # Zero padding is safe: we accumulate raw sums and divide by the true H*W.
        ch = jnp.pad(ch, ((0, 0), (0, hw_pad - hw)))
    n_tiles = hw_pad // hw_tile

    kernel = functools.partial(_objective_kernel,
                               inv_hw=1.0 / float(hw), inv_b=1.0 / float(B))

    out11 = jax.ShapeDtypeStruct((1, 1), jnp.float32)
    bytes_accessed = (B * hw_pad * itemsize
                      + B * int(jnp.dtype(dec.dtype).itemsize)
                      + 2 * B * D * int(jnp.dtype(img_feats.dtype).itemsize)
                      + 3 * 4)

    loss, loss_clip, loss_act = pl.pallas_call(
        kernel,
        out_shape=(out11, out11, out11),
        grid_spec=pltpu.PrefetchScalarGridSpec(
            num_scalar_prefetch=0,
            grid=(n_tiles,),
            in_specs=[
                pl.BlockSpec((B, hw_tile), lambda t: (0, t)),      # streamed channel tiles
                pl.BlockSpec((B, 1), lambda t: (0, 0)),            # resident logits column
                pl.BlockSpec((B, D), lambda t: (0, 0)),            # resident img feats
                pl.BlockSpec((B, D), lambda t: (0, 0)),            # resident text feats
            ],
            out_specs=(
                pl.BlockSpec((1, 1), lambda t: (0, 0)),
                pl.BlockSpec((1, 1), lambda t: (0, 0)),
                pl.BlockSpec((1, 1), lambda t: (0, 0)),
            ),
            scratch_shapes=[pltpu.VMEM((B, 1), jnp.float32)],
        ),
        compiler_params=pltpu.CompilerParams(
            dimension_semantics=("arbitrary",)),
        cost_estimate=pl.CostEstimate(
            flops=2 * B * hw_pad + 4 * B * D + 8 * B,
            transcendentals=0,
            bytes_accessed=bytes_accessed),
    )(ch, dec, img_feats, text_feats)

    if WO_CLIP:
        return (-1.0 * loss_act[0, 0],)
    return (loss[0, 0], loss_clip[0, 0], loss_act[0, 0])


def _reference(layer_out, decision_out, img_feats, text_feats):
    # Pure-JAX reference mirroring the PyTorch module.
    B, C, H, W = layer_out.shape
    act = layer_out.reshape(B, C, -1).mean(-1)[:, CHANNEL_NUMBER]
    logits = decision_out[:, CLASS_IDX]
    loss_act = act + logits * CLASS_GAMMA
    loss_clip = jnp.diag(img_feats @ text_feats.T)
    loss = -1.0 * (loss_clip + DOMAIN_EPS) * loss_act
    return loss.mean(), loss_clip.mean(), loss_act.mean()


if __name__ == "__main__":
    key = jax.random.PRNGKey(0)
    k1, k2, k3, k4 = jax.random.split(key, 4)

    B, C, H, W = 2, 4, 16, 16
    NUM_CLASSES = 10
    D = 32

    layer_out = jax.random.normal(k1, (B, C, H, W), dtype=jnp.float32)
    decision_out = jax.random.normal(k2, (B, NUM_CLASSES), dtype=jnp.float32)
    img_feats = jax.random.normal(k3, (B, D), dtype=jnp.float32)
    text_feats = jax.random.normal(k4, (B, D), dtype=jnp.float32)

    out = class_conditional_objective(layer_out, decision_out, img_feats, text_feats)
    out = jax.block_until_ready(out)

    ref = _reference(layer_out, decision_out, img_feats, text_feats)
    for o, r in zip(out, ref):
        assert jnp.allclose(o, r, atol=1e-5, rtol=1e-5), (o, r)

    print("KERNEL_OK")
</pallas_src>

<mosaic_0001>
module attributes {stable_mosaic.version = 11 : i64} {
  func.func @_objective_kernel(%arg0: i32, %arg1: memref<2x256xf32, #tpu.memory_space<vmem>>, %arg2: memref<2x1xf32, #tpu.memory_space<vmem>>, %arg3: memref<2x32xf32, #tpu.memory_space<vmem>>, %arg4: memref<2x32xf32, #tpu.memory_space<vmem>>, %arg5: memref<1x1xf32, #tpu.memory_space<vmem>>, %arg6: memref<1x1xf32, #tpu.memory_space<vmem>>, %arg7: memref<1x1xf32, #tpu.memory_space<vmem>>, %arg8: memref<2x1xf32, #tpu.memory_space<vmem>>) attributes {dimension_semantics = [#tpu.dimension_semantics<arbitrary>], iteration_bounds = array<i64: 1>, scalar_prefetch = 0 : i64, scratch_operands = 1 : i64, tpu.core_type = #tpu.core_type<tc>, window_params = [{transform_indices = @transform_0, window_bounds = array<i64: 2, 256>}, {pipeline_mode = #tpu.pipeline_mode<synchronous>, transform_indices = @transform_1, window_bounds = array<i64: 2, 1>}, {pipeline_mode = #tpu.pipeline_mode<synchronous>, transform_indices = @transform_2, window_bounds = array<i64: 2, 32>}, {pipeline_mode = #tpu.pipeline_mode<synchronous>, transform_indices = @transform_3, window_bounds = array<i64: 2, 32>}, {pipeline_mode = #tpu.pipeline_mode<synchronous>, transform_indices = @transform_4, window_bounds = array<i64: 1, 1>}, {pipeline_mode = #tpu.pipeline_mode<synchronous>, transform_indices = @transform_5, window_bounds = array<i64: 1, 1>}, {pipeline_mode = #tpu.pipeline_mode<synchronous>, transform_indices = @transform_6, window_bounds = array<i64: 1, 1>}]} {
    %c0_i32 = arith.constant 0 : i32
    %0 = arith.cmpi eq, %arg0, %c0_i32 : i32
    %1 = arith.extui %0 : i1 to i32
    %c0_i32_0 = arith.constant 0 : i32
    %2 = arith.cmpi ne, %1, %c0_i32_0 : i32
    scf.if %2 {
      %cst_8 = arith.constant 0.000000e+00 : f32
      %12 = vector.broadcast %cst_8 : f32 to vector<2x1xf32>
      %c0_9 = arith.constant 0 : index
      %c0_10 = arith.constant 0 : index
      %13 = vector.load %arg8[%c0_9, %c0_10] : memref<2x1xf32, #tpu.memory_space<vmem>>, vector<2x1xf32>
      tpu.vector_store %arg8[%c0_9, %c0_10], %12 {strides = array<i32>} : memref<2x1xf32, #tpu.memory_space<vmem>>, vector<2x1xf32>,
    } else {
    }
    %c0 = arith.constant 0 : index
    %c0_1 = arith.constant 0 : index
    %3 = vector.load %arg1[%c0, %c0_1] : memref<2x256xf32, #tpu.memory_space<vmem>>, vector<2x256xf32>
    %c0_2 = arith.constant 0 : index
    %c0_3 = arith.constant 0 : index
    %4 = vector.load %arg8[%c0_2, %c0_3] : memref<2x1xf32, #tpu.memory_space<vmem>>, vector<2x1xf32>
    %cst = arith.constant dense<0.000000e+00> : vector<2xf32>
    %5 = vector.multi_reduction <add>, %3, %cst [1] : vector<2x256xf32> to vector<2xf32>
    %6 = vector.shape_cast %5 : vector<2xf32> to vector<2x1xf32>
    %7 = arith.addf %4, %6 : vector<2x1xf32>
    %c0_4 = arith.constant 0 : index
    %c0_5 = arith.constant 0 : index
    %8 = vector.load %arg8[%c0_4, %c0_5] : memref<2x1xf32, #tpu.memory_space<vmem>>, vector<2x1xf32>
    tpu.vector_store %arg8[%c0_4, %c0_5], %7 {strides = array<i32>} : memref<2x1xf32, #tpu.memory_space<vmem>>, vector<2x1xf32>,
    %c0_i32_6 = arith.constant 0 : i32
    %9 = arith.cmpi eq, %arg0, %c0_i32_6 : i32
    %10 = arith.extui %9 : i1 to i32
    %c0_i32_7 = arith.constant 0 : i32
    %11 = arith.cmpi ne, %10, %c0_i32_7 : i32
    scf.if %11 {
      %c0_8 = arith.constant 0 : index
      %c0_9 = arith.constant 0 : index
      %12 = vector.load %arg8[%c0_8, %c0_9] : memref<2x1xf32, #tpu.memory_space<vmem>>, vector<2x1xf32>
      %cst_10 = arith.constant 3.906250e-03 : f32
      %13 = vector.broadcast %cst_10 : f32 to vector<2x1xf32>
      %14 = arith.mulf %12, %13 : vector<2x1xf32>
      %c0_11 = arith.constant 0 : index
      %c0_12 = arith.constant 0 : index
      %15 = vector.load %arg2[%c0_11, %c0_12] : memref<2x1xf32, #tpu.memory_space<vmem>>, vector<2x1xf32>
      %cst_13 = arith.constant 5.000000e-01 : f32
      %16 = vector.broadcast %cst_13 : f32 to vector<2x1xf32>
      %17 = arith.mulf %15, %16 : vector<2x1xf32>
      %18 = arith.addf %14, %17 : vector<2x1xf32>
      %c0_14 = arith.constant 0 : index
      %c0_15 = arith.constant 0 : index
      %19 = vector.load %arg3[%c0_14, %c0_15] : memref<2x32xf32, #tpu.memory_space<vmem>>, vector<2x32xf32>
      %c0_16 = arith.constant 0 : index
      %c0_17 = arith.constant 0 : index
      %20 = vector.load %arg4[%c0_16, %c0_17] : memref<2x32xf32, #tpu.memory_space<vmem>>, vector<2x32xf32>
      %21 = arith.mulf %19, %20 : vector<2x32xf32>
      %cst_18 = arith.constant dense<0.000000e+00> : vector<2xf32>
      %22 = vector.multi_reduction <add>, %21, %cst_18 [1] : vector<2x32xf32> to vector<2xf32>
      %23 = vector.shape_cast %22 : vector<2xf32> to vector<2x1xf32>
      %cst_19 = arith.constant 0.00999999977 : f32
      %24 = vector.broadcast %cst_19 : f32 to vector<2x1xf32>
      %25 = arith.addf %23, %24 : vector<2x1xf32>
      %cst_20 = arith.constant -1.000000e+00 : f32
      %26 = vector.broadcast %cst_20 : f32 to vector<2x1xf32>
      %27 = arith.mulf %26, %25 : vector<2x1xf32>
      %28 = arith.mulf %27, %18 : vector<2x1xf32>
      %29 = vector.shape_cast %28 : vector<2x1xf32> to vector<1x2x1xf32>
      %cst_21 = arith.constant dense<0.000000e+00> : vector<1xf32>
      %30 = vector.multi_reduction <add>, %29, %cst_21 [1, 2] : vector<1x2x1xf32> to vector<1xf32>
      %31 = vector.shape_cast %30 : vector<1xf32> to vector<1x1x1xf32>
      %32 = vector.extract %31[0, 0, 0] : f32 from vector<1x1x1xf32>
      %33 = vector.broadcast %32 : f32 to vector<1x1xf32>
      %cst_22 = arith.constant 5.000000e-01 : f32
      %34 = vector.broadcast %cst_22 : f32 to vector<1x1xf32>
      %35 = arith.mulf %33, %34 : vector<1x1xf32>
      %c0_23 = arith.constant 0 : index
      %c0_24 = arith.constant 0 : index
      %36 = vector.load %arg5[%c0_23, %c0_24] : memref<1x1xf32, #tpu.memory_space<vmem>>, vector<1x1xf32>
      tpu.vector_store %arg5[%c0_23, %c0_24], %35 {strides = array<i32>} : memref<1x1xf32, #tpu.memory_space<vmem>>, vector<1x1xf32>,
      %37 = vector.shape_cast %23 : vector<2x1xf32> to vector<1x2x1xf32>
      %cst_25 = arith.constant dense<0.000000e+00> : vector<1xf32>
      %38 = vector.multi_reduction <add>, %37, %cst_25 [1, 2] : vector<1x2x1xf32> to vector<1xf32>
      %39 = vector.shape_cast %38 : vector<1xf32> to vector<1x1x1xf32>
      %40 = vector.extract %39[0, 0, 0] : f32 from vector<1x1x1xf32>
      %41 = vector.broadcast %40 : f32 to vector<1x1xf32>
      %cst_26 = arith.constant 5.000000e-01 : f32
      %42 = vector.broadcast %cst_26 : f32 to vector<1x1xf32>
      %43 = arith.mulf %41, %42 : vector<1x1xf32>
      %c0_27 = arith.constant 0 : index
      %c0_28 = arith.constant 0 : index
      %44 = vector.load %arg6[%c0_27, %c0_28] : memref<1x1xf32, #tpu.memory_space<vmem>>, vector<1x1xf32>
      tpu.vector_store %arg6[%c0_27, %c0_28], %43 {strides = array<i32>} : memref<1x1xf32, #tpu.memory_space<vmem>>, vector<1x1xf32>,
      %45 = vector.shape_cast %18 : vector<2x1xf32> to vector<1x2x1xf32>
      %cst_29 = arith.constant dense<0.000000e+00> : vector<1xf32>
      %46 = vector.multi_reduction <add>, %45, %cst_29 [1, 2] : vector<1x2x1xf32> to vector<1xf32>
      %47 = vector.shape_cast %46 : vector<1xf32> to vector<1x1x1xf32>
      %48 = vector.extract %47[0, 0, 0] : f32 from vector<1x1x1xf32>
      %49 = vector.broadcast %48 : f32 to vector<1x1xf32>
      %cst_30 = arith.constant 5.000000e-01 : f32
      %50 = vector.broadcast %cst_30 : f32 to vector<1x1xf32>
      %51 = arith.mulf %49, %50 : vector<1x1xf32>
      %c0_31 = arith.constant 0 : index
      %c0_32 = arith.constant 0 : index
      %52 = vector.load %arg7[%c0_31, %c0_32] : memref<1x1xf32, #tpu.memory_space<vmem>>, vector<1x1xf32>
      tpu.vector_store %arg7[%c0_31, %c0_32], %51 {strides = array<i32>} : memref<1x1xf32, #tpu.memory_space<vmem>>, vector<1x1xf32>,
    } else {
    }
    return
  }
  func.func @transform_0(%arg0: i32) -> (i32, i32) {
    %c0_i32 = arith.constant 0 : i32
    %c0_i32_0 = arith.constant 0 : i32
    return %c0_i32, %arg0 : i32, i32
  }
  func.func @transform_1(%arg0: i32) -> (i32, i32) {
    %c0_i32 = arith.constant 0 : i32
    %c0_i32_0 = arith.constant 0 : i32
    %c0_i32_1 = arith.constant 0 : i32
    return %c0_i32, %c0_i32_0 : i32, i32
  }
  func.func @transform_2(%arg0: i32) -> (i32, i32) {
    %c0_i32 = arith.constant 0 : i32
    %c0_i32_0 = arith.constant 0 : i32
    %c0_i32_1 = arith.constant 0 : i32
    return %c0_i32, %c0_i32_0 : i32, i32
  }
  func.func @transform_3(%arg0: i32) -> (i32, i32) {
    %c0_i32 = arith.constant 0 : i32
    %c0_i32_0 = arith.constant 0 : i32
    %c0_i32_1 = arith.constant 0 : i32
    return %c0_i32, %c0_i32_0 : i32, i32
  }
  func.func @transform_4(%arg0: i32) -> (i32, i32) {
    %c0_i32 = arith.constant 0 : i32
    %c0_i32_0 = arith.constant 0 : i32
    %c0_i32_1 = arith.constant 0 : i32
    return %c0_i32, %c0_i32_0 : i32, i32
  }
  func.func @transform_5(%arg0: i32) -> (i32, i32) {
    %c0_i32 = arith.constant 0 : i32
    %c0_i32_0 = arith.constant 0 : i32
    %c0_i32_1 = arith.constant 0 : i32
    return %c0_i32, %c0_i32_0 : i32, i32
  }
  func.func @transform_6(%arg0: i32) -> (i32, i32) {
    %c0_i32 = arith.constant 0 : i32
    %c0_i32_0 = arith.constant 0 : i32
    %c0_i32_1 = arith.constant 0 : i32
    return %c0_i32, %c0_i32_0 : i32, i32
  }
}

</mosaic_0001>

<llo_original>
// kernel: tpu_custom_call.1
$region0: #{tpu_custom_call.1}
  #allocation0 [shape = 'u32[]', space=smem, size = 0x4, offset = 0x4, fixed_abs, tag = 'smem constant byte address 0x4 - core index']
  #allocation1 [shape = 'u32[144,128]{1,0:T(1,128)}', space=vmem, size = 0x12000, scoped, tag = 'internal scratch']
  #allocation2 [shape = 'f32[2,1]{1,0:T(2,128)}', space=vmem, size = 0x400, scoped, tag = 'scratch operand']
  %s0 = inlined_call_operand.hbm [shape: f32[2,256], index: 0, kind: input, shape index: {}]
  %s1 = inlined_call_operand.vmem [shape: f32[2,1], index: 1, kind: input, shape index: {}]
  %s2 = inlined_call_operand.vmem [shape: f32[2,32], index: 2, kind: input, shape index: {}]
  %s3 = inlined_call_operand.vmem [shape: f32[2,32], index: 3, kind: input, shape index: {}]
  %s4 = inlined_call_operand.hbm [shape: f32[1,1], index: 4, kind: output, shape index: {0}]
  %s5 = inlined_call_operand.hbm [shape: f32[1,1], index: 5, kind: output, shape index: {1}]
  %s6 = inlined_call_operand.hbm [shape: f32[1,1], index: 6, kind: output, shape index: {2}]
  %7 = xla_tuple %s4, %s5, %s6
  %s8 = sld [smem:[#allocation0]]
  $region54: #{tpu_custom_call.1} parent=0
    _
  %s10 = ssub.s32 1, %s8
  %s11 = scalar_select 0, %s10, %s8
  $region1: #{tpu_custom_call.1} parent=0
    #allocation3 [shape = 'u8[2048]{0}', space=vmem, size = 0x800, scoped, tag = 'input window, operand 0, single buffered']
    #allocation4 [shape = 's32[1]{0}', space=sflag, size = 0x4, scoped, tag = 'scoped memory for tpu_custom_call.1']
    #allocation5 [shape = 's32[1]{0}', space=sflag, size = 0x4, scoped, tag = 'scoped memory for tpu_custom_call.1']
    #allocation6 [shape = 'u8[512]{0}', space=vmem, size = 0x400, scoped, tag = 'output window, operand 0, single buffered']
    #allocation7 [shape = 'u8[512]{0}', space=vmem, size = 0x400, scoped, tag = 'output window, operand 1, single buffered']
    #allocation8 [shape = 's32[1]{0}', space=sflag, size = 0x4, scoped, tag = 'scoped memory for tpu_custom_call.1']
    #allocation9 [shape = 'u8[512]{0}', space=vmem, size = 0x400, scoped, tag = 'output window, operand 2, single buffered']
    %12 = vsyncpa [#allocation4], 0
    %13 = vsyncpa [#allocation5], 0
    %14 = vsyncpa [#allocation8], 0
    // Predicated region
    $region2: #{tpu_custom_call.1} parent=1 // pred_check
      _
    $region3: #{tpu_custom_call.1} parent=1 // pred_check_branch
      %16 = sbr.rel (0) target = $region5
    $region4: #{tpu_custom_call.1} parent=1 // pred_region
      %s18 = ssub.s32 64, 64
      %19 = vsyncadd [#allocation4], %s18
      %s21 = sshll.u32 [#allocation3], 4
      %s22 = int_to_ptr.vmem [resolvable:$true] %s21
      %24 = dma.hbm_to_vmem [thread:$0]  %s0, 64, %s22, [#allocation4]
    $region5: #{tpu_custom_call.1} parent=1 // pred_fallthru
      _
    // Predicated region
    $region6: #{tpu_custom_call.1} parent=1 // pred_check
      _
    $region7: #{tpu_custom_call.1} parent=1 // pred_check_branch
      %26 = sbr.rel (0) target = $region9
    $region8: #{tpu_custom_call.1} parent=1 // pred_region
      _
    $region9: #{tpu_custom_call.1} parent=1 // pred_fallthru
      _
    // Predicated region
    $region10: #{tpu_custom_call.1} parent=1 // pred_check
      _
    $region11: #{tpu_custom_call.1} parent=1 // pred_check_branch
      %28 = sbr.rel (0) target = $region13
    $region12: #{tpu_custom_call.1} parent=1 // pred_region
      _
    $region13: #{tpu_custom_call.1} parent=1 // pred_fallthru
      _
    // Predicated region
    $region14: #{tpu_custom_call.1} parent=1 // pred_check
      _
    $region15: #{tpu_custom_call.1} parent=1 // pred_check_branch
      %30 = sbr.rel (0) target = $region17
    $region16: #{tpu_custom_call.1} parent=1 // pred_region
      _
    $region17: #{tpu_custom_call.1} parent=1 // pred_fallthru
      _
    // Predicated region
    $region18: #{tpu_custom_call.1} parent=1 // pred_check
      _
    $region19: #{tpu_custom_call.1} parent=1 // pred_check_branch
      %32 = sbr.rel (0) target = $region21
    $region20: #{tpu_custom_call.1} parent=1 // pred_region
      %33 = dma.done [#allocation4], 64
    $region21: #{tpu_custom_call.1} parent=1 // pred_fallthru
      _
    %p34 = scmp.eq.s32.totalorder 0, 0
    // Predicated region
    $region22: #{tpu_custom_call.1} parent=1 // pred_check
      %p35 = pneg %p34
    $region23: #{tpu_custom_call.1} parent=1 // pred_check_branch
      %37 = sbr.rel (%p35) target = $region25
    $region24: #{tpu_custom_call.1} parent=1 // pred_region
      %vm38 = vcmask 1024
      %39 = vst.msk [vmem:[#allocation2] sm:$0x3] %vm38, 0.0
    $region25: #{tpu_custom_call.1} parent=1 // pred_fallthru
      _
    %v40 = vld [vmem:[#allocation3] sm:$0xf]
    %v41 = vld [vmem:[#allocation2] sm:$0x3]
    %v44 = vunpack.c.l.s4 1983009808
    %v45 = vunpack.c.0.s8 %v44
    %v46 = vlaneseq
    %v47 = vshrl.u32 %v46, 7
    %v48 = vsub.s32 %v45, %v47
    %v49 = vrot.slane %v40, %v48
    %v50 = vcombine.high %v49, %v49
    %vm53 = vcmask 1041408
    %v54 = vsel %vm53, %v49, 0.0
    %v55 = vsel %vm53, %v50, 0.0
    %v56 = vadd.f32 %v54, %v55
    %57 = vadd.xlane.f32.xlu0 %v56
    %v58 = vpop.xlane.xlu0 %57
    %v59 = vadd.f32 %v41, %v58
    %vm60 = vcmask 1024
    %61 = vst.msk [vmem:[#allocation2] sm:$0x3] %vm60, %v59
    // Predicated region
    $region26: #{tpu_custom_call.1} parent=1 // pred_check
      %p62 = pneg %p34
    $region27: #{tpu_custom_call.1} parent=1 // pred_check_branch
      %64 = sbr.rel (%p62) target = $region29
    $region28: #{tpu_custom_call.1} parent=1 // pred_region
      %v65 = vld [vmem:[#allocation2] sm:$0x3]
      %v66 = vmul.f32 %v65, 0.00390625
      %v67 = vld [vmem:[%s1] sm:$0x3]
      %v68 = vmul.f32 %v67, 0.5
      %v69 = vadd.f32 %v66, %v68
      %v70 = vld [vmem:[%s2] sm:$0x3]
      %v71 = vld [vmem:[%s3] sm:$0x3]
      %v72 = vmul.f32 %v70, %v71
      %vm73 = vcmask 254976
      %v74 = vsel %vm73, %v72, 0.0
      %75 = vadd.xlane.f32.xlu0 %v74
      %v76 = vpop.xlane.xlu0 %75
      %v77 = vadd.f32 %v76, 0.01
      %v78 = vmul.f32 %v77, -1.0
      %v79 = vmul.f32 %v78, %v69
      %v80 = vsel %vm60, %v79, 0.0
      %81 = vadd.xlane.f32.xlu0 %v80
      %v82 = vpop.xlane.xlu0 %81
      %v83 = vrot.slane %v82, 4
      %v84 = vadd.f32 %v82, %v83
      %v85 = vrot.slane %v84, 2
      %v86 = vadd.f32 %v84, %v85
      %v87 = vrot.slane %v86, 1
      %v88 = vadd.f32 %v86, %v87
      %s89 = vtos %v88
      %v90 = vstv %s89
      %v91 = vmul.f32 %v90, 0.5
      %vm92 = vcmask 0
      %93 = vst.msk [vmem:[#allocation6] sm:$0x1] %vm92, %v91
      %v94 = vsel %vm60, %v76, 0.0
      %95 = vadd.xlane.f32.xlu0 %v94
      %v96 = vpop.xlane.xlu0 %95
      %v97 = vrot.slane %v96, 4
      %v98 = vadd.f32 %v96, %v97
      %v99 = vrot.slane %v98, 2
      %v100 = vadd.f32 %v98, %v99
      %v101 = vrot.slane %v100, 1
      %v102 = vadd.f32 %v100, %v101
      %s103 = vtos %v102
      %v104 = vstv %s103
      %v105 = vmul.f32 %v104, 0.5
      %106 = vst.msk [vmem:[#allocation7] sm:$0x1] %vm92, %v105
      %v107 = vsel %vm60, %v69, 0.0
      %108 = vadd.xlane.f32.xlu0 %v107
      %v109 = vpop.xlane.xlu0 %108
      %v110 = vrot.slane %v109, 4
      %v111 = vadd.f32 %v109, %v110
      %v112 = vrot.slane %v111, 2
      %v113 = vadd.f32 %v111, %v112
      %v114 = vrot.slane %v113, 1
      %v115 = vadd.f32 %v113, %v114
      %s116 = vtos %v115
      %v117 = vstv %s116
      %v118 = vmul.f32 %v117, 0.5
      %119 = vst.msk [vmem:[#allocation9] sm:$0x1] %vm92, %v118
    $region29: #{tpu_custom_call.1} parent=1 // pred_fallthru
      _
    // Predicated region
    $region30: #{tpu_custom_call.1} parent=1 // pred_check
      _
    $region31: #{tpu_custom_call.1} parent=1 // pred_check_branch
      %121 = sbr.rel (0) target = $region33
    $region32: #{tpu_custom_call.1} parent=1 // pred_region
      %s123 = ssub.s32 16, 16
      %124 = vsyncadd [#allocation5], %s123
      %s126 = sshll.u32 [#allocation6], 4
      %s127 = int_to_ptr.vmem [resolvable:$true] %s126
      %129 = dma.vmem_to_hbm [thread:$0]  %s127, 16, %s4, [#allocation5]
    $region33: #{tpu_custom_call.1} parent=1 // pred_fallthru
      _
    // Predicated region
    $region34: #{tpu_custom_call.1} parent=1 // pred_check
      _
    $region35: #{tpu_custom_call.1} parent=1 // pred_check_branch
      %131 = sbr.rel (0) target = $region37
    $region36: #{tpu_custom_call.1} parent=1 // pred_region
      %s133 = ssub.s32 16, 16
      %134 = vsyncadd [#allocation8], %s133
      %s136 = sshll.u32 [#allocation7], 4
      %s137 = int_to_ptr.vmem [resolvable:$true] %s136
      %139 = dma.vmem_to_hbm [thread:$0]  %s137, 16, %s5, [#allocation8]
    $region37: #{tpu_custom_call.1} parent=1 // pred_fallthru
      _
    // Predicated region
    $region38: #{tpu_custom_call.1} parent=1 // pred_check
      _
    $region39: #{tpu_custom_call.1} parent=1 // pred_check_branch
      %141 = sbr.rel (0) target = $region41
    $region40: #{tpu_custom_call.1} parent=1 // pred_region
      %s143 = ssub.s32 16, 16
      %144 = vsyncadd [#allocation8], %s143
      %s146 = sshll.u32 [#allocation9], 4
      %s147 = int_to_ptr.vmem [resolvable:$true] %s146
      %149 = dma.vmem_to_hbm [thread:$0]  %s147, 16, %s6, [#allocation8]
    $region41: #{tpu_custom_call.1} parent=1 // pred_fallthru
      _
    // Predicated region
    $region42: #{tpu_custom_call.1} parent=1 // pred_check
      _
    $region43: #{tpu_custom_call.1} parent=1 // pred_check_branch
      %151 = sbr.rel (0) target = $region45
    $region44: #{tpu_custom_call.1} parent=1 // pred_region
      %152 = dma.done [#allocation5], 16
    $region45: #{tpu_custom_call.1} parent=1 // pred_fallthru
      _
    // Predicated region
    $region46: #{tpu_custom_call.1} parent=1 // pred_check
      _
    $region47: #{tpu_custom_call.1} parent=1 // pred_check_branch
      %154 = sbr.rel (0) target = $region49
    $region48: #{tpu_custom_call.1} parent=1 // pred_region
      %155 = dma.done [#allocation8], 16
    $region49: #{tpu_custom_call.1} parent=1 // pred_fallthru
      _
    // Predicated region
    $region50: #{tpu_custom_call.1} parent=1 // pred_check
      _
    $region51: #{tpu_custom_call.1} parent=1 // pred_check_branch
      %157 = sbr.rel (0) target = $region53
    $region52: #{tpu_custom_call.1} parent=1 // pred_region
      %158 = dma.done [#allocation8], 16
    $region53: #{tpu_custom_call.1} parent=1 // pred_fallthru
      _
    %159 = vsyncpa [#allocation4], 1
    %160 = vsyncpa [#allocation5], 1
    %161 = vsyncpa [#allocation8], 1

</llo_original>
